<compile_context>
chip_gen: v5e
topology: v5e:2x2
jax: 0.10.0
libtpu: 0.0.40
codegen_flags: <defaults>
</compile_context>

<pallas_src>
import functools

import jax
import jax.numpy as jnp
from jax.experimental import pallas as pl
from jax.experimental.pallas import tpu as pltpu


# --------------------------- Fused Net kernel -------------------------------

def net_kernel(x_ref, wih_ref, whh_ref, b_ref, wd_ref, bd_ref,
               preds_ref, hc_ref, gx_ref, lasth_ref, *, b_last):
    # x_ref    : (S*Bp, I)  time-major input, batch padded to Bp, flattened
    # wih_ref  : (I, 4H)    W_ih^T (pre-transposed in wrapper)
    # whh_ref  : (H, 4H)    W_hh^T
    # b_ref    : (1, 4H)    b_ih + b_hh
    # wd_ref   : (H, O)     W_d^T
    # bd_ref   : (1, O)     b_d
    # preds_ref: (S, O)     dense(all_h[:, -1, :])
    # hc_ref   : (Bp, 2H)   [h_n | c_n] packed along lanes
    # gx_ref   : (S*Bp, 4H) VMEM scratch: hoisted input projection
    # lasth_ref: (S, H)     VMEM scratch: all_h[:, -1, :] rows
    H = whh_ref.shape[0]
    Bp = hc_ref.shape[0]
    S = lasth_ref.shape[0]

    # Hoisted input projection + folded bias: one MXU call for all timesteps,
    # stashed in VMEM scratch (per-step chunks are re-loaded inside the loop).
    gx_ref[...] = (jnp.dot(x_ref[...], wih_ref[...],
                           preferred_element_type=jnp.float32)
                   + b_ref[...])                              # (S*Bp, 4H)

    whh = whh_ref[...]                                        # (H, 4H), load once

    def step(t, carry):
        h, c = carry
        row0 = pl.multiple_of(t * Bp, Bp)                     # sublane-aligned
        gates = gx_ref[pl.ds(row0, Bp), :] + jnp.dot(
            h, whh, preferred_element_type=jnp.float32)       # (Bp, 4H)

        # One EUP push per nonlinearity over the packed 4H lanes; slice after.
        # PyTorch gate ordering: i, f, g, o.
        sig = jax.nn.sigmoid(gates)
        th = jnp.tanh(gates)
        i_g = sig[:, 0 * H:1 * H]
        f_g = sig[:, 1 * H:2 * H]
        g_g = th[:, 2 * H:3 * H]
        o_g = sig[:, 3 * H:4 * H]

        c_new = f_g * c + i_g * g_g
        h_new = o_g * jnp.tanh(c_new)

        # all_h[:, -1, :] row for this timestep = last REAL batch element.
        lasth_ref[pl.ds(t, 1), :] = h_new[b_last:b_last + 1, :]
        return h_new, c_new

    h0 = jnp.zeros((Bp, H), jnp.float32)
    c0 = jnp.zeros((Bp, H), jnp.float32)
    h, c = jax.lax.fori_loop(0, S, step, (h0, c0), unroll=True)

    # Fused dense epilogue on the on-chip (S, H) slab.
    preds_ref[...] = (jnp.dot(lasth_ref[...], wd_ref[...],
                              preferred_element_type=jnp.float32)
                      + bd_ref[...]).astype(preds_ref.dtype)

    # Single lane-denser store for (h_n | c_n) instead of two tiny outputs.
    hc_ref[...] = jnp.concatenate([h, c], axis=1).astype(hc_ref.dtype)


def net_forward(x, params):
    """Reproduces Net.forward: returns (all_predictions, (h_n, c_n))."""
    S, B, I = x.shape
    H = params["w_hh"].shape[1]
    O = params["w_d"].shape[0]

    # Pad batch to a full f32 sublane tile (multiple of 8). Padded rows carry
    # zero input and zero initial state; they never interact with real rows
    # and are sliced off at output time.
    Bp = max(8, ((B + 7) // 8) * 8)
    if Bp != B:
        x = jnp.pad(x, ((0, 0), (0, Bp - B), (0, 0)))

    wih_t = params["w_ih"].T                                 # (I, 4H)
    whh_t = params["w_hh"].T                                 # (H, 4H)
    b = (params["b_ih"] + params["b_hh"]).reshape(1, 4 * H)  # (1, 4H)
    wd_t = params["w_d"].T                                   # (H, O)
    bd = params["b_d"].reshape(1, O)                         # (1, O)
    x2 = x.reshape(S * Bp, I)

    kernel = functools.partial(net_kernel, b_last=B - 1)

    preds, hc = pl.pallas_call(
        kernel,
        out_shape=(jax.ShapeDtypeStruct((S, O), jnp.float32),
                   jax.ShapeDtypeStruct((Bp, 2 * H), jnp.float32)),
        in_specs=[pl.BlockSpec((S * Bp, I), lambda: (0, 0)),
                  pl.BlockSpec((I, 4 * H), lambda: (0, 0)),
                  pl.BlockSpec((H, 4 * H), lambda: (0, 0)),
                  pl.BlockSpec((1, 4 * H), lambda: (0, 0)),
                  pl.BlockSpec((H, O), lambda: (0, 0)),
                  pl.BlockSpec((1, O), lambda: (0, 0))],
        out_specs=(pl.BlockSpec((S, O), lambda: (0, 0)),
                   pl.BlockSpec((Bp, 2 * H), lambda: (0, 0))),
        scratch_shapes=[pltpu.VMEM((S * Bp, 4 * H), jnp.float32),
                        pltpu.VMEM((S, H), jnp.float32)],
    )(x2, wih_t, whh_t, b, wd_t, bd)

    h_n = hc[:B, :H]
    c_n = hc[:B, H:]
    # Add the num_layers=1 axis to match nn.LSTM's (num_layers, B, H) outputs.
    return preds, (h_n[None], c_n[None])

    # TODO(synk): for batched inference over many independent sequences, add a
    # leading "parallel" grid axis over sequences (weights fixed per block) to
    # amortize the per-call launch cost and engage both v7x TensorCores.


# --------------------------- Pure-JAX reference -----------------------------

def net_forward_ref(x, params):
    H = params["w_hh"].shape[1]
    b = params["b_ih"] + params["b_hh"]

    def step(carry, x_t):
        h, c = carry
        gates = x_t @ params["w_ih"].T + h @ params["w_hh"].T + b
        i = jax.nn.sigmoid(gates[:, 0 * H:1 * H])
        f = jax.nn.sigmoid(gates[:, 1 * H:2 * H])
        g = jnp.tanh(gates[:, 2 * H:3 * H])
        o = jax.nn.sigmoid(gates[:, 3 * H:4 * H])
        c_new = f * c + i * g
        h_new = o * jnp.tanh(c_new)
        return (h_new, c_new), h_new

    B = x.shape[1]
    h0 = jnp.zeros((B, H), jnp.float32)
    c0 = jnp.zeros((B, H), jnp.float32)
    (h_n, c_n), all_h = jax.lax.scan(step, (h0, c0), x)
    preds = all_h[:, -1, :] @ params["w_d"].T + params["b_d"]
    return preds, (h_n[None], c_n[None])


# ----------------------------------------------------------------------------

def init_params(key, input_dim, hidden_dim, output_dim):
    # PyTorch-style uniform init U(-1/sqrt(H), 1/sqrt(H)), deterministic.
    ks = jax.random.split(key, 8)
    kH = 1.0 / jnp.sqrt(hidden_dim)
    u = lambda k, shape, s: jax.random.uniform(k, shape, jnp.float32, -s, s)
    return {
        "w_ih": u(ks[0], (4 * hidden_dim, input_dim), kH),
        "w_hh": u(ks[1], (4 * hidden_dim, hidden_dim), kH),
        "b_ih": u(ks[2], (4 * hidden_dim,), kH),
        "b_hh": u(ks[3], (4 * hidden_dim,), kH),
        "w_d":  u(ks[4], (output_dim, hidden_dim), kH),
        "b_d":  u(ks[5], (output_dim,), kH),
    }


if __name__ == "__main__":
    SEQ, BATCH, INPUT_DIM, HIDDEN_DIM, OUTPUT_DIM = 8, 2, 16, 32, 4

    key = jax.random.PRNGKey(0)
    k_x, k_p = jax.random.split(key)
    x = jax.random.normal(k_x, (SEQ, BATCH, INPUT_DIM), jnp.float32)
    params = init_params(k_p, INPUT_DIM, HIDDEN_DIM, OUTPUT_DIM)

    preds, (h_n, c_n) = net_forward(x, params)
    preds = jax.block_until_ready(preds)
    h_n = jax.block_until_ready(h_n)
    c_n = jax.block_until_ready(c_n)

    preds_ref, (h_ref, c_ref) = net_forward_ref(x, params)
    assert preds.shape == (SEQ, OUTPUT_DIM)
    assert h_n.shape == (1, BATCH, HIDDEN_DIM)
    assert c_n.shape == (1, BATCH, HIDDEN_DIM)
    assert jnp.allclose(preds, preds_ref, atol=1e-3, rtol=1e-3)
    assert jnp.allclose(h_n, h_ref, atol=1e-3, rtol=1e-3)
    assert jnp.allclose(c_n, c_ref, atol=1e-3, rtol=1e-3)

    print("KERNEL_OK")
</pallas_src>

<mosaic_0001>
module attributes {stable_mosaic.version = 11 : i64} {
  func.func @net_kernel(%arg0: memref<64x16xf32, #tpu.memory_space<vmem>>, %arg1: memref<16x128xf32, #tpu.memory_space<vmem>>, %arg2: memref<32x128xf32, #tpu.memory_space<vmem>>, %arg3: memref<1x128xf32, #tpu.memory_space<vmem>>, %arg4: memref<32x4xf32, #tpu.memory_space<vmem>>, %arg5: memref<1x4xf32, #tpu.memory_space<vmem>>, %arg6: memref<8x4xf32, #tpu.memory_space<vmem>>, %arg7: memref<8x64xf32, #tpu.memory_space<vmem>>, %arg8: memref<64x128xf32, #tpu.memory_space<vmem>>, %arg9: memref<8x32xf32, #tpu.memory_space<vmem>>) attributes {dimension_semantics = [], scalar_prefetch = 0 : i64, scratch_operands = 2 : i64, tpu.core_type = #tpu.core_type<tc>} {
    %c0 = arith.constant 0 : index
    %c0_0 = arith.constant 0 : index
    %0 = vector.load %arg0[%c0, %c0_0] : memref<64x16xf32, #tpu.memory_space<vmem>>, vector<64x16xf32>
    %c0_1 = arith.constant 0 : index
    %c0_2 = arith.constant 0 : index
    %1 = vector.load %arg1[%c0_1, %c0_2] : memref<16x128xf32, #tpu.memory_space<vmem>>, vector<16x128xf32>
    %cst = arith.constant dense<0.000000e+00> : vector<64x128xf32>
    %2 = tpu.matmul %0, %1, %cst {dimension_numbers = #tpu.dot_dimension_numbers<[1], [0], [0], [1], [0, 0, 1, 1], [], []>} : vector<64x16xf32>, vector<16x128xf32>, vector<64x128xf32> -> vector<64x128xf32>
    %c0_3 = arith.constant 0 : index
    %c0_4 = arith.constant 0 : index
    %3 = vector.load %arg3[%c0_3, %c0_4] : memref<1x128xf32, #tpu.memory_space<vmem>>, vector<1x128xf32>
    %4 = vector.broadcast %3 : vector<1x128xf32> to vector<64x128xf32>
    %5 = arith.addf %2, %4 : vector<64x128xf32>
    %c0_5 = arith.constant 0 : index
    %c0_6 = arith.constant 0 : index
    %6 = vector.load %arg8[%c0_5, %c0_6] : memref<64x128xf32, #tpu.memory_space<vmem>>, vector<64x128xf32>
    tpu.vector_store %arg8[%c0_5, %c0_6], %5 {strides = array<i32>} : memref<64x128xf32, #tpu.memory_space<vmem>>, vector<64x128xf32>,
    %c0_7 = arith.constant 0 : index
    %c0_8 = arith.constant 0 : index
    %7 = vector.load %arg2[%c0_7, %c0_8] : memref<32x128xf32, #tpu.memory_space<vmem>>, vector<32x128xf32>
    %cst_9 = arith.constant 0.000000e+00 : f32
    %8 = vector.broadcast %cst_9 : f32 to vector<8x32xf32>
    %cst_10 = arith.constant 0.000000e+00 : f32
    %9 = vector.broadcast %cst_10 : f32 to vector<8x32xf32>
    %c0_i32 = arith.constant 0 : i32
    %c8_i32 = arith.constant 8 : i32
    %10 = arith.muli %c0_i32, %c8_i32 : i32
    %11 = tpu.assume_multiple %10, 8 : i32
    %12 = arith.index_cast %11 : i32 to index
    %c0_11 = arith.constant 0 : index
    %13 = vector.load %arg8[%12, %c0_11] : memref<64x128xf32, #tpu.memory_space<vmem>>, vector<8x128xf32>
    %cst_12 = arith.constant dense<0.000000e+00> : vector<8x128xf32>
    %14 = tpu.matmul %8, %7, %cst_12 {dimension_numbers = #tpu.dot_dimension_numbers<[1], [0], [0], [1], [0, 0, 1, 1], [], []>} : vector<8x32xf32>, vector<32x128xf32>, vector<8x128xf32> -> vector<8x128xf32>
    %15 = arith.addf %13, %14 : vector<8x128xf32>
    %16 = arith.negf %15 : vector<8x128xf32>
    %17 = math.exp %16 : vector<8x128xf32>
    %cst_13 = arith.constant 1.000000e+00 : f32
    %18 = vector.broadcast %cst_13 : f32 to vector<8x128xf32>
    %19 = arith.addf %18, %17 : vector<8x128xf32>
    %20 = arith.divf %18, %19 : vector<8x128xf32>
    %21 = math.tanh %15 : vector<8x128xf32>
    %22 = vector.extract_strided_slice %20 {offsets = [0, 0], sizes = [8, 32], strides = [1, 1]} : vector<8x128xf32> to vector<8x32xf32>
    %23 = vector.extract_strided_slice %20 {offsets = [0, 32], sizes = [8, 32], strides = [1, 1]} : vector<8x128xf32> to vector<8x32xf32>
    %24 = vector.extract_strided_slice %21 {offsets = [0, 64], sizes = [8, 32], strides = [1, 1]} : vector<8x128xf32> to vector<8x32xf32>
    %25 = vector.extract_strided_slice %20 {offsets = [0, 96], sizes = [8, 32], strides = [1, 1]} : vector<8x128xf32> to vector<8x32xf32>
    %26 = arith.mulf %23, %9 : vector<8x32xf32>
    %27 = arith.mulf %22, %24 : vector<8x32xf32>
    %28 = arith.addf %26, %27 : vector<8x32xf32>
    %29 = math.tanh %28 : vector<8x32xf32>
    %30 = arith.mulf %25, %29 : vector<8x32xf32>
    %31 = vector.extract_strided_slice %30 {offsets = [1, 0], sizes = [1, 32], strides = [1, 1]} : vector<8x32xf32> to vector<1x32xf32>
    %32 = arith.index_cast %c0_i32 : i32 to index
    %c0_14 = arith.constant 0 : index
    %33 = vector.load %arg9[%32, %c0_14] : memref<8x32xf32, #tpu.memory_space<vmem>>, vector<1x32xf32>
    tpu.vector_store %arg9[%32, %c0_14], %31 {strides = array<i32>} : memref<8x32xf32, #tpu.memory_space<vmem>>, vector<1x32xf32>,
    %c1_i32 = arith.constant 1 : i32
    %c8_i32_15 = arith.constant 8 : i32
    %34 = arith.muli %c1_i32, %c8_i32_15 : i32
    %35 = tpu.assume_multiple %34, 8 : i32
    %36 = arith.index_cast %35 : i32 to index
    %c0_16 = arith.constant 0 : index
    %37 = vector.load %arg8[%36, %c0_16] : memref<64x128xf32, #tpu.memory_space<vmem>>, vector<8x128xf32>
    %cst_17 = arith.constant dense<0.000000e+00> : vector<8x128xf32>
    %38 = tpu.matmul %30, %7, %cst_17 {dimension_numbers = #tpu.dot_dimension_numbers<[1], [0], [0], [1], [0, 0, 1, 1], [], []>} : vector<8x32xf32>, vector<32x128xf32>, vector<8x128xf32> -> vector<8x128xf32>
    %39 = arith.addf %37, %38 : vector<8x128xf32>
    %40 = arith.negf %39 : vector<8x128xf32>
    %41 = math.exp %40 : vector<8x128xf32>
    %cst_18 = arith.constant 1.000000e+00 : f32
    %42 = vector.broadcast %cst_18 : f32 to vector<8x128xf32>
    %43 = arith.addf %42, %41 : vector<8x128xf32>
    %44 = arith.divf %42, %43 : vector<8x128xf32>
    %45 = math.tanh %39 : vector<8x128xf32>
    %46 = vector.extract_strided_slice %44 {offsets = [0, 0], sizes = [8, 32], strides = [1, 1]} : vector<8x128xf32> to vector<8x32xf32>
    %47 = vector.extract_strided_slice %44 {offsets = [0, 32], sizes = [8, 32], strides = [1, 1]} : vector<8x128xf32> to vector<8x32xf32>
    %48 = vector.extract_strided_slice %45 {offsets = [0, 64], sizes = [8, 32], strides = [1, 1]} : vector<8x128xf32> to vector<8x32xf32>
    %49 = vector.extract_strided_slice %44 {offsets = [0, 96], sizes = [8, 32], strides = [1, 1]} : vector<8x128xf32> to vector<8x32xf32>
    %50 = arith.mulf %47, %28 : vector<8x32xf32>
    %51 = arith.mulf %46, %48 : vector<8x32xf32>
    %52 = arith.addf %50, %51 : vector<8x32xf32>
    %53 = math.tanh %52 : vector<8x32xf32>
    %54 = arith.mulf %49, %53 : vector<8x32xf32>
    %55 = vector.extract_strided_slice %54 {offsets = [1, 0], sizes = [1, 32], strides = [1, 1]} : vector<8x32xf32> to vector<1x32xf32>
    %56 = arith.index_cast %c1_i32 : i32 to index
    %c0_19 = arith.constant 0 : index
    %57 = vector.load %arg9[%56, %c0_19] : memref<8x32xf32, #tpu.memory_space<vmem>>, vector<1x32xf32>
    tpu.vector_store %arg9[%56, %c0_19], %55 {strides = array<i32>} : memref<8x32xf32, #tpu.memory_space<vmem>>, vector<1x32xf32>,
    %c2_i32 = arith.constant 2 : i32
    %c8_i32_20 = arith.constant 8 : i32
    %58 = arith.muli %c2_i32, %c8_i32_20 : i32
    %59 = tpu.assume_multiple %58, 8 : i32
    %60 = arith.index_cast %59 : i32 to index
    %c0_21 = arith.constant 0 : index
    %61 = vector.load %arg8[%60, %c0_21] : memref<64x128xf32, #tpu.memory_space<vmem>>, vector<8x128xf32>
    %cst_22 = arith.constant dense<0.000000e+00> : vector<8x128xf32>
    %62 = tpu.matmul %54, %7, %cst_22 {dimension_numbers = #tpu.dot_dimension_numbers<[1], [0], [0], [1], [0, 0, 1, 1], [], []>} : vector<8x32xf32>, vector<32x128xf32>, vector<8x128xf32> -> vector<8x128xf32>
    %63 = arith.addf %61, %62 : vector<8x128xf32>
    %64 = arith.negf %63 : vector<8x128xf32>
    %65 = math.exp %64 : vector<8x128xf32>
    %cst_23 = arith.constant 1.000000e+00 : f32
    %66 = vector.broadcast %cst_23 : f32 to vector<8x128xf32>
    %67 = arith.addf %66, %65 : vector<8x128xf32>
    %68 = arith.divf %66, %67 : vector<8x128xf32>
    %69 = math.tanh %63 : vector<8x128xf32>
    %70 = vector.extract_strided_slice %68 {offsets = [0, 0], sizes = [8, 32], strides = [1, 1]} : vector<8x128xf32> to vector<8x32xf32>
    %71 = vector.extract_strided_slice %68 {offsets = [0, 32], sizes = [8, 32], strides = [1, 1]} : vector<8x128xf32> to vector<8x32xf32>
    %72 = vector.extract_strided_slice %69 {offsets = [0, 64], sizes = [8, 32], strides = [1, 1]} : vector<8x128xf32> to vector<8x32xf32>
    %73 = vector.extract_strided_slice %68 {offsets = [0, 96], sizes = [8, 32], strides = [1, 1]} : vector<8x128xf32> to vector<8x32xf32>
    %74 = arith.mulf %71, %52 : vector<8x32xf32>
    %75 = arith.mulf %70, %72 : vector<8x32xf32>
    %76 = arith.addf %74, %75 : vector<8x32xf32>
    %77 = math.tanh %76 : vector<8x32xf32>
    %78 = arith.mulf %73, %77 : vector<8x32xf32>
    %79 = vector.extract_strided_slice %78 {offsets = [1, 0], sizes = [1, 32], strides = [1, 1]} : vector<8x32xf32> to vector<1x32xf32>
    %80 = arith.index_cast %c2_i32 : i32 to index
    %c0_24 = arith.constant 0 : index
    %81 = vector.load %arg9[%80, %c0_24] : memref<8x32xf32, #tpu.memory_space<vmem>>, vector<1x32xf32>
    tpu.vector_store %arg9[%80, %c0_24], %79 {strides = array<i32>} : memref<8x32xf32, #tpu.memory_space<vmem>>, vector<1x32xf32>,
    %c3_i32 = arith.constant 3 : i32
    %c8_i32_25 = arith.constant 8 : i32
    %82 = arith.muli %c3_i32, %c8_i32_25 : i32
    %83 = tpu.assume_multiple %82, 8 : i32
    %84 = arith.index_cast %83 : i32 to index
    %c0_26 = arith.constant 0 : index
    %85 = vector.load %arg8[%84, %c0_26] : memref<64x128xf32, #tpu.memory_space<vmem>>, vector<8x128xf32>
    %cst_27 = arith.constant dense<0.000000e+00> : vector<8x128xf32>
    %86 = tpu.matmul %78, %7, %cst_27 {dimension_numbers = #tpu.dot_dimension_numbers<[1], [0], [0], [1], [0, 0, 1, 1], [], []>} : vector<8x32xf32>, vector<32x128xf32>, vector<8x128xf32> -> vector<8x128xf32>
    %87 = arith.addf %85, %86 : vector<8x128xf32>
    %88 = arith.negf %87 : vector<8x128xf32>
    %89 = math.exp %88 : vector<8x128xf32>
    %cst_28 = arith.constant 1.000000e+00 : f32
    %90 = vector.broadcast %cst_28 : f32 to vector<8x128xf32>
    %91 = arith.addf %90, %89 : vector<8x128xf32>
    %92 = arith.divf %90, %91 : vector<8x128xf32>
    %93 = math.tanh %87 : vector<8x128xf32>
    %94 = vector.extract_strided_slice %92 {offsets = [0, 0], sizes = [8, 32], strides = [1, 1]} : vector<8x128xf32> to vector<8x32xf32>
    %95 = vector.extract_strided_slice %92 {offsets = [0, 32], sizes = [8, 32], strides = [1, 1]} : vector<8x128xf32> to vector<8x32xf32>
    %96 = vector.extract_strided_slice %93 {offsets = [0, 64], sizes = [8, 32], strides = [1, 1]} : vector<8x128xf32> to vector<8x32xf32>
    %97 = vector.extract_strided_slice %92 {offsets = [0, 96], sizes = [8, 32], strides = [1, 1]} : vector<8x128xf32> to vector<8x32xf32>
    %98 = arith.mulf %95, %76 : vector<8x32xf32>
    %99 = arith.mulf %94, %96 : vector<8x32xf32>
    %100 = arith.addf %98, %99 : vector<8x32xf32>
    %101 = math.tanh %100 : vector<8x32xf32>
    %102 = arith.mulf %97, %101 : vector<8x32xf32>
    %103 = vector.extract_strided_slice %102 {offsets = [1, 0], sizes = [1, 32], strides = [1, 1]} : vector<8x32xf32> to vector<1x32xf32>
    %104 = arith.index_cast %c3_i32 : i32 to index
    %c0_29 = arith.constant 0 : index
    %105 = vector.load %arg9[%104, %c0_29] : memref<8x32xf32, #tpu.memory_space<vmem>>, vector<1x32xf32>
    tpu.vector_store %arg9[%104, %c0_29], %103 {strides = array<i32>} : memref<8x32xf32, #tpu.memory_space<vmem>>, vector<1x32xf32>,
    %c4_i32 = arith.constant 4 : i32
    %c8_i32_30 = arith.constant 8 : i32
    %106 = arith.muli %c4_i32, %c8_i32_30 : i32
    %107 = tpu.assume_multiple %106, 8 : i32
    %108 = arith.index_cast %107 : i32 to index
    %c0_31 = arith.constant 0 : index
    %109 = vector.load %arg8[%108, %c0_31] : memref<64x128xf32, #tpu.memory_space<vmem>>, vector<8x128xf32>
    %cst_32 = arith.constant dense<0.000000e+00> : vector<8x128xf32>
    %110 = tpu.matmul %102, %7, %cst_32 {dimension_numbers = #tpu.dot_dimension_numbers<[1], [0], [0], [1], [0, 0, 1, 1], [], []>} : vector<8x32xf32>, vector<32x128xf32>, vector<8x128xf32> -> vector<8x128xf32>
    %111 = arith.addf %109, %110 : vector<8x128xf32>
    %112 = arith.negf %111 : vector<8x128xf32>
    %113 = math.exp %112 : vector<8x128xf32>
    %cst_33 = arith.constant 1.000000e+00 : f32
    %114 = vector.broadcast %cst_33 : f32 to vector<8x128xf32>
    %115 = arith.addf %114, %113 : vector<8x128xf32>
    %116 = arith.divf %114, %115 : vector<8x128xf32>
    %117 = math.tanh %111 : vector<8x128xf32>
    %118 = vector.extract_strided_slice %116 {offsets = [0, 0], sizes = [8, 32], strides = [1, 1]} : vector<8x128xf32> to vector<8x32xf32>
    %119 = vector.extract_strided_slice %116 {offsets = [0, 32], sizes = [8, 32], strides = [1, 1]} : vector<8x128xf32> to vector<8x32xf32>
    %120 = vector.extract_strided_slice %117 {offsets = [0, 64], sizes = [8, 32], strides = [1, 1]} : vector<8x128xf32> to vector<8x32xf32>
    %121 = vector.extract_strided_slice %116 {offsets = [0, 96], sizes = [8, 32], strides = [1, 1]} : vector<8x128xf32> to vector<8x32xf32>
    %122 = arith.mulf %119, %100 : vector<8x32xf32>
    %123 = arith.mulf %118, %120 : vector<8x32xf32>
    %124 = arith.addf %122, %123 : vector<8x32xf32>
    %125 = math.tanh %124 : vector<8x32xf32>
    %126 = arith.mulf %121, %125 : vector<8x32xf32>
    %127 = vector.extract_strided_slice %126 {offsets = [1, 0], sizes = [1, 32], strides = [1, 1]} : vector<8x32xf32> to vector<1x32xf32>
    %128 = arith.index_cast %c4_i32 : i32 to index
    %c0_34 = arith.constant 0 : index
    %129 = vector.load %arg9[%128, %c0_34] : memref<8x32xf32, #tpu.memory_space<vmem>>, vector<1x32xf32>
    tpu.vector_store %arg9[%128, %c0_34], %127 {strides = array<i32>} : memref<8x32xf32, #tpu.memory_space<vmem>>, vector<1x32xf32>,
    %c5_i32 = arith.constant 5 : i32
    %c8_i32_35 = arith.constant 8 : i32
    %130 = arith.muli %c5_i32, %c8_i32_35 : i32
    %131 = tpu.assume_multiple %130, 8 : i32
    %132 = arith.index_cast %131 : i32 to index
    %c0_36 = arith.constant 0 : index
    %133 = vector.load %arg8[%132, %c0_36] : memref<64x128xf32, #tpu.memory_space<vmem>>, vector<8x128xf32>
    %cst_37 = arith.constant dense<0.000000e+00> : vector<8x128xf32>
    %134 = tpu.matmul %126, %7, %cst_37 {dimension_numbers = #tpu.dot_dimension_numbers<[1], [0], [0], [1], [0, 0, 1, 1], [], []>} : vector<8x32xf32>, vector<32x128xf32>, vector<8x128xf32> -> vector<8x128xf32>
    %135 = arith.addf %133, %134 : vector<8x128xf32>
    %136 = arith.negf %135 : vector<8x128xf32>
    %137 = math.exp %136 : vector<8x128xf32>
    %cst_38 = arith.constant 1.000000e+00 : f32
    %138 = vector.broadcast %cst_38 : f32 to vector<8x128xf32>
    %139 = arith.addf %138, %137 : vector<8x128xf32>
    %140 = arith.divf %138, %139 : vector<8x128xf32>
    %141 = math.tanh %135 : vector<8x128xf32>
    %142 = vector.extract_strided_slice %140 {offsets = [0, 0], sizes = [8, 32], strides = [1, 1]} : vector<8x128xf32> to vector<8x32xf32>
    %143 = vector.extract_strided_slice %140 {offsets = [0, 32], sizes = [8, 32], strides = [1, 1]} : vector<8x128xf32> to vector<8x32xf32>
    %144 = vector.extract_strided_slice %141 {offsets = [0, 64], sizes = [8, 32], strides = [1, 1]} : vector<8x128xf32> to vector<8x32xf32>
    %145 = vector.extract_strided_slice %140 {offsets = [0, 96], sizes = [8, 32], strides = [1, 1]} : vector<8x128xf32> to vector<8x32xf32>
    %146 = arith.mulf %143, %124 : vector<8x32xf32>
    %147 = arith.mulf %142, %144 : vector<8x32xf32>
    %148 = arith.addf %146, %147 : vector<8x32xf32>
    %149 = math.tanh %148 : vector<8x32xf32>
    %150 = arith.mulf %145, %149 : vector<8x32xf32>
    %151 = vector.extract_strided_slice %150 {offsets = [1, 0], sizes = [1, 32], strides = [1, 1]} : vector<8x32xf32> to vector<1x32xf32>
    %152 = arith.index_cast %c5_i32 : i32 to index
    %c0_39 = arith.constant 0 : index
    %153 = vector.load %arg9[%152, %c0_39] : memref<8x32xf32, #tpu.memory_space<vmem>>, vector<1x32xf32>
    tpu.vector_store %arg9[%152, %c0_39], %151 {strides = array<i32>} : memref<8x32xf32, #tpu.memory_space<vmem>>, vector<1x32xf32>,
    %c6_i32 = arith.constant 6 : i32
    %c8_i32_40 = arith.constant 8 : i32
    %154 = arith.muli %c6_i32, %c8_i32_40 : i32
    %155 = tpu.assume_multiple %154, 8 : i32
    %156 = arith.index_cast %155 : i32 to index
    %c0_41 = arith.constant 0 : index
    %157 = vector.load %arg8[%156, %c0_41] : memref<64x128xf32, #tpu.memory_space<vmem>>, vector<8x128xf32>
    %cst_42 = arith.constant dense<0.000000e+00> : vector<8x128xf32>
    %158 = tpu.matmul %150, %7, %cst_42 {dimension_numbers = #tpu.dot_dimension_numbers<[1], [0], [0], [1], [0, 0, 1, 1], [], []>} : vector<8x32xf32>, vector<32x128xf32>, vector<8x128xf32> -> vector<8x128xf32>
    %159 = arith.addf %157, %158 : vector<8x128xf32>
    %160 = arith.negf %159 : vector<8x128xf32>
    %161 = math.exp %160 : vector<8x128xf32>
    %cst_43 = arith.constant 1.000000e+00 : f32
    %162 = vector.broadcast %cst_43 : f32 to vector<8x128xf32>
    %163 = arith.addf %162, %161 : vector<8x128xf32>
    %164 = arith.divf %162, %163 : vector<8x128xf32>
    %165 = math.tanh %159 : vector<8x128xf32>
    %166 = vector.extract_strided_slice %164 {offsets = [0, 0], sizes = [8, 32], strides = [1, 1]} : vector<8x128xf32> to vector<8x32xf32>
    %167 = vector.extract_strided_slice %164 {offsets = [0, 32], sizes = [8, 32], strides = [1, 1]} : vector<8x128xf32> to vector<8x32xf32>
    %168 = vector.extract_strided_slice %165 {offsets = [0, 64], sizes = [8, 32], strides = [1, 1]} : vector<8x128xf32> to vector<8x32xf32>
    %169 = vector.extract_strided_slice %164 {offsets = [0, 96], sizes = [8, 32], strides = [1, 1]} : vector<8x128xf32> to vector<8x32xf32>
    %170 = arith.mulf %167, %148 : vector<8x32xf32>
    %171 = arith.mulf %166, %168 : vector<8x32xf32>
    %172 = arith.addf %170, %171 : vector<8x32xf32>
    %173 = math.tanh %172 : vector<8x32xf32>
    %174 = arith.mulf %169, %173 : vector<8x32xf32>
    %175 = vector.extract_strided_slice %174 {offsets = [1, 0], sizes = [1, 32], strides = [1, 1]} : vector<8x32xf32> to vector<1x32xf32>
    %176 = arith.index_cast %c6_i32 : i32 to index
    %c0_44 = arith.constant 0 : index
    %177 = vector.load %arg9[%176, %c0_44] : memref<8x32xf32, #tpu.memory_space<vmem>>, vector<1x32xf32>
    tpu.vector_store %arg9[%176, %c0_44], %175 {strides = array<i32>} : memref<8x32xf32, #tpu.memory_space<vmem>>, vector<1x32xf32>,
    %c7_i32 = arith.constant 7 : i32
    %c8_i32_45 = arith.constant 8 : i32
    %178 = arith.muli %c7_i32, %c8_i32_45 : i32
    %179 = tpu.assume_multiple %178, 8 : i32
    %180 = arith.index_cast %179 : i32 to index
    %c0_46 = arith.constant 0 : index
    %181 = vector.load %arg8[%180, %c0_46] : memref<64x128xf32, #tpu.memory_space<vmem>>, vector<8x128xf32>
    %cst_47 = arith.constant dense<0.000000e+00> : vector<8x128xf32>
    %182 = tpu.matmul %174, %7, %cst_47 {dimension_numbers = #tpu.dot_dimension_numbers<[1], [0], [0], [1], [0, 0, 1, 1], [], []>} : vector<8x32xf32>, vector<32x128xf32>, vector<8x128xf32> -> vector<8x128xf32>
    %183 = arith.addf %181, %182 : vector<8x128xf32>
    %184 = arith.negf %183 : vector<8x128xf32>
    %185 = math.exp %184 : vector<8x128xf32>
    %cst_48 = arith.constant 1.000000e+00 : f32
    %186 = vector.broadcast %cst_48 : f32 to vector<8x128xf32>
    %187 = arith.addf %186, %185 : vector<8x128xf32>
    %188 = arith.divf %186, %187 : vector<8x128xf32>
    %189 = math.tanh %183 : vector<8x128xf32>
    %190 = vector.extract_strided_slice %188 {offsets = [0, 0], sizes = [8, 32], strides = [1, 1]} : vector<8x128xf32> to vector<8x32xf32>
    %191 = vector.extract_strided_slice %188 {offsets = [0, 32], sizes = [8, 32], strides = [1, 1]} : vector<8x128xf32> to vector<8x32xf32>
    %192 = vector.extract_strided_slice %189 {offsets = [0, 64], sizes = [8, 32], strides = [1, 1]} : vector<8x128xf32> to vector<8x32xf32>
    %193 = vector.extract_strided_slice %188 {offsets = [0, 96], sizes = [8, 32], strides = [1, 1]} : vector<8x128xf32> to vector<8x32xf32>
    %194 = arith.mulf %191, %172 : vector<8x32xf32>
    %195 = arith.mulf %190, %192 : vector<8x32xf32>
    %196 = arith.addf %194, %195 : vector<8x32xf32>
    %197 = math.tanh %196 : vector<8x32xf32>
    %198 = arith.mulf %193, %197 : vector<8x32xf32>
    %199 = vector.extract_strided_slice %198 {offsets = [1, 0], sizes = [1, 32], strides = [1, 1]} : vector<8x32xf32> to vector<1x32xf32>
    %200 = arith.index_cast %c7_i32 : i32 to index
    %c0_49 = arith.constant 0 : index
    %201 = vector.load %arg9[%200, %c0_49] : memref<8x32xf32, #tpu.memory_space<vmem>>, vector<1x32xf32>
    tpu.vector_store %arg9[%200, %c0_49], %199 {strides = array<i32>} : memref<8x32xf32, #tpu.memory_space<vmem>>, vector<1x32xf32>,
    %c8_i32_50 = arith.constant 8 : i32
    %c0_51 = arith.constant 0 : index
    %c0_52 = arith.constant 0 : index
    %202 = vector.load %arg9[%c0_51, %c0_52] : memref<8x32xf32, #tpu.memory_space<vmem>>, vector<8x32xf32>
    %c0_53 = arith.constant 0 : index
    %c0_54 = arith.constant 0 : index
    %203 = vector.load %arg4[%c0_53, %c0_54] : memref<32x4xf32, #tpu.memory_space<vmem>>, vector<32x4xf32>
    %cst_55 = arith.constant dense<0.000000e+00> : vector<8x4xf32>
    %204 = tpu.matmul %202, %203, %cst_55 {dimension_numbers = #tpu.dot_dimension_numbers<[1], [0], [0], [1], [0, 0, 1, 1], [], []>} : vector<8x32xf32>, vector<32x4xf32>, vector<8x4xf32> -> vector<8x4xf32>
    %c0_56 = arith.constant 0 : index
    %c0_57 = arith.constant 0 : index
    %205 = vector.load %arg5[%c0_56, %c0_57] : memref<1x4xf32, #tpu.memory_space<vmem>>, vector<1x4xf32>
    %206 = vector.broadcast %205 : vector<1x4xf32> to vector<8x4xf32>
    %207 = arith.addf %204, %206 : vector<8x4xf32>
    %c0_58 = arith.constant 0 : index
    %c0_59 = arith.constant 0 : index
    %208 = vector.load %arg6[%c0_58, %c0_59] : memref<8x4xf32, #tpu.memory_space<vmem>>, vector<8x4xf32>
    tpu.vector_store %arg6[%c0_58, %c0_59], %207 {strides = array<i32>} : memref<8x4xf32, #tpu.memory_space<vmem>>, vector<8x4xf32>,
    %209 = tpu.concatenate %198, %196 in 1 : vector<8x32xf32>, vector<8x32xf32> -> vector<8x64xf32>
    %c0_60 = arith.constant 0 : index
    %c0_61 = arith.constant 0 : index
    %210 = vector.load %arg7[%c0_60, %c0_61] : memref<8x64xf32, #tpu.memory_space<vmem>>, vector<8x64xf32>
    tpu.vector_store %arg7[%c0_60, %c0_61], %209 {strides = array<i32>} : memref<8x64xf32, #tpu.memory_space<vmem>>, vector<8x64xf32>,
    return
  }
}

</mosaic_0001>

<llo_original>
// kernel: tpu_custom_call.1
$region0: #{tpu_custom_call.1}
  #allocation0 [shape = 'u32[]', space=smem, size = 0x4, offset = 0x4, fixed_abs, tag = 'smem constant byte address 0x4 - core index']
  #allocation1 [shape = 'u32[72,128]{1,0:T(1,128)}', space=vmem, size = 0x9000, scoped, tag = 'internal scratch']
  #allocation2 [shape = 'f32[64,128]{1,0:T(8,128)}', space=vmem, size = 0x8000, scoped, tag = 'scratch operand']
  #allocation3 [shape = 'f32[8,32]{1,0:T(8,128)}', space=vmem, size = 0x1000, scoped, tag = 'scratch operand']
  %s0 = inlined_call_operand.vmem [shape: f32[64,16], index: 0, kind: input, shape index: {}]
  %s1 = inlined_call_operand.vmem [shape: f32[16,128], index: 1, kind: input, shape index: {}]
  %s2 = inlined_call_operand.vmem [shape: f32[32,128], index: 2, kind: input, shape index: {}]
  %s3 = inlined_call_operand.vmem [shape: f32[1,128], index: 3, kind: input, shape index: {}]
  %s4 = inlined_call_operand.vmem [shape: f32[32,4], index: 4, kind: input, shape index: {}]
  %s5 = inlined_call_operand.vmem [shape: f32[1,4], index: 5, kind: input, shape index: {}]
  %s6 = inlined_call_operand.vmem [shape: f32[8,4], index: 6, kind: output, shape index: {0}]
  %s7 = inlined_call_operand.hbm [shape: f32[8,64], index: 7, kind: output, shape index: {1}]
  %8 = xla_tuple %s6, %s7
  %s9 = sld [smem:[#allocation0]]
  $region42: #{tpu_custom_call.1} parent=0
    _
  %s11 = ssub.s32 1, %s9
  %s12 = scalar_select 0, %s11, %s9
  $region1: #{tpu_custom_call.1} parent=0
    #allocation4 [shape = 'u8[4096]{0}', space=vmem, size = 0x1000, scoped, tag = 'output window, operand 1, single buffered']
    #allocation5 [shape = 's32[1]{0}', space=sflag, size = 0x4, scoped, tag = 'scoped memory for tpu_custom_call.1']
    %13 = vsyncpa [#allocation5], 0
    // Predicated region
    $region2: #{tpu_custom_call.1} parent=1 // pred_check
      _
    $region3: #{tpu_custom_call.1} parent=1 // pred_check_branch
      %15 = sbr.rel (0) target = $region5
    $region4: #{tpu_custom_call.1} parent=1 // pred_region
      _
    $region5: #{tpu_custom_call.1} parent=1 // pred_fallthru
      _
    // Predicated region
    $region6: #{tpu_custom_call.1} parent=1 // pred_check
      _
    $region7: #{tpu_custom_call.1} parent=1 // pred_check_branch
      %17 = sbr.rel (0) target = $region9
    $region8: #{tpu_custom_call.1} parent=1 // pred_region
      _
    $region9: #{tpu_custom_call.1} parent=1 // pred_fallthru
      _
    // Predicated region
    $region10: #{tpu_custom_call.1} parent=1 // pred_check
      _
    $region11: #{tpu_custom_call.1} parent=1 // pred_check_branch
      %19 = sbr.rel (0) target = $region13
    $region12: #{tpu_custom_call.1} parent=1 // pred_region
      _
    $region13: #{tpu_custom_call.1} parent=1 // pred_fallthru
      _
    // Predicated region
    $region14: #{tpu_custom_call.1} parent=1 // pred_check
      _
    $region15: #{tpu_custom_call.1} parent=1 // pred_check_branch
      %21 = sbr.rel (0) target = $region17
    $region16: #{tpu_custom_call.1} parent=1 // pred_region
      _
    $region17: #{tpu_custom_call.1} parent=1 // pred_fallthru
      _
    // Predicated region
    $region18: #{tpu_custom_call.1} parent=1 // pred_check
      _
    $region19: #{tpu_custom_call.1} parent=1 // pred_check_branch
      %23 = sbr.rel (0) target = $region21
    $region20: #{tpu_custom_call.1} parent=1 // pred_region
      _
    $region21: #{tpu_custom_call.1} parent=1 // pred_fallthru
      _
    // Predicated region
    $region22: #{tpu_custom_call.1} parent=1 // pred_check
      _
    $region23: #{tpu_custom_call.1} parent=1 // pred_check_branch
      %25 = sbr.rel (0) target = $region25
    $region24: #{tpu_custom_call.1} parent=1 // pred_region
      _
    $region25: #{tpu_custom_call.1} parent=1 // pred_fallthru
      _
    %v26 = vld [vmem:[%s0] sm:$0xff]
    %v27 = vld [vmem:[%s0 + $0x8] sm:$0xff]
    %v28 = vld [vmem:[%s0 + $0x10] sm:$0xff]
    %v29 = vld [vmem:[%s0 + $0x18] sm:$0xff]
    %v30 = vld [vmem:[%s0 + $0x20] sm:$0xff]
    %v31 = vld [vmem:[%s0 + $0x28] sm:$0xff]
    %v32 = vld [vmem:[%s0 + $0x30] sm:$0xff]
    %v33 = vld [vmem:[%s0 + $0x38] sm:$0xff]
    %v34 = vld [vmem:[%s1] sm:$0xff]
    %v35 = vld [vmem:[%s1 + $0x8] sm:$0xff]
    %v36 = vld [vmem:[%s3] sm:$0x1]
    %v38 = vperm.slane %v36, 0
    %vm40 = vcmask 130048
    %v42 = vsel %vm40, %v26, 0
    %v45 = vsel %vm40, %v27, 0
    %v48 = vsel %vm40, %v28, 0
    %v51 = vsel %vm40, %v29, 0
    %v54 = vsel %vm40, %v30, 0
    %v57 = vsel %vm40, %v31, 0
    %v60 = vsel %vm40, %v32, 0
    %v63 = vsel %vm40, %v33, 0
    %65 = vmatpush.msra.mxu0 0.0
    %66 = vmatpush.msra.mxu0 0.0
    %67 = vmatpush.msra.mxu0 0.0
    %68 = vmatpush.msra.mxu0 0.0
    %69 = vmatpush.msra.mxu0 0.0
    %70 = vmatpush.msra.mxu0 0.0
    %71 = vmatpush.msra.mxu0 0.0
    %72 = vmatpush.msra.mxu0 0.0
    %73 = vmatpush.msra.mxu0 0.0
    %74 = vmatpush.msra.mxu0 0.0
    %75 = vmatpush.msra.mxu0 0.0
    %76 = vmatpush.msra.mxu0 0.0
    %77 = vmatpush.msra.mxu0 0.0
    %78 = vmatpush.msra.mxu0 0.0
    %79 = vmatpush.msra.mxu0 %v35
    %80 = vmatpush.msra.mxu0 %v34
    %81 = vmatmul.f32.gmra.mxu0 %v42
    %v82 = vpop.f32.mrf.mxu0
    %v83 = vadd.f32 %v38, %v82
    %84 = vmatmul.f32.gmra.mxu0 %v45
    %v85 = vpop.f32.mrf.mxu0
    %v86 = vadd.f32 %v38, %v85
    %87 = vmatmul.f32.gmra.mxu0 %v48
    %v88 = vpop.f32.mrf.mxu0
    %v89 = vadd.f32 %v38, %v88
    %90 = vmatmul.f32.gmra.mxu0 %v51
    %v91 = vpop.f32.mrf.mxu0
    %v92 = vadd.f32 %v38, %v91
    %93 = vmatmul.f32.gmra.mxu0 %v54
    %v94 = vpop.f32.mrf.mxu0
    %v95 = vadd.f32 %v38, %v94
    %96 = vmatmul.f32.gmra.mxu0 %v57
    %v97 = vpop.f32.mrf.mxu0
    %v98 = vadd.f32 %v38, %v97
    %99 = vmatmul.f32.gmra.mxu0 %v60
    %v100 = vpop.f32.mrf.mxu0
    %v101 = vadd.f32 %v38, %v100
    %102 = vmatmul.f32.gmra.mxu0 %v63
    %v103 = vpop.f32.mrf.mxu0
    %v104 = vadd.f32 %v38, %v103
    %105 = vdwg.mxu0
    %106 = vst [vmem:[#allocation2] sm:$0xff] %v83
    %107 = vst [vmem:[#allocation2 + $0x8] sm:$0xff] %v86
    %108 = vst [vmem:[#allocation2 + $0x10] sm:$0xff] %v89
    %109 = vst [vmem:[#allocation2 + $0x18] sm:$0xff] %v92
    %110 = vst [vmem:[#allocation2 + $0x20] sm:$0xff] %v95
    %111 = vst [vmem:[#allocation2 + $0x28] sm:$0xff] %v98
    %112 = vst [vmem:[#allocation2 + $0x30] sm:$0xff] %v101
    %113 = vst [vmem:[#allocation2 + $0x38] sm:$0xff] %v104
    %v114 = vld [vmem:[%s2] sm:$0xff]
    %v115 = vld [vmem:[%s2 + $0x8] sm:$0xff]
    %v116 = vld [vmem:[%s2 + $0x10] sm:$0xff]
    %v117 = vld [vmem:[%s2 + $0x18] sm:$0xff]
    %v118 = vld [vmem:[#allocation2] sm:$0xff]
    %vm119 = vcmask 261120
    %v121 = vsel %vm119, 0.0, 0
    %123 = vmatpush.msra.mxu0 0.0
    %124 = vmatpush.msra.mxu0 0.0
    %125 = vmatpush.msra.mxu0 0.0
    %126 = vmatpush.msra.mxu0 0.0
    %127 = vmatpush.msra.mxu0 0.0
    %128 = vmatpush.msra.mxu0 0.0
    %129 = vmatpush.msra.mxu0 0.0
    %130 = vmatpush.msra.mxu0 0.0
    %131 = vmatpush.msra.mxu0 0.0
    %132 = vmatpush.msra.mxu0 0.0
    %133 = vmatpush.msra.mxu0 0.0
    %134 = vmatpush.msra.mxu0 0.0
    %135 = vmatpush.msra.mxu0 %v117
    %136 = vmatpush.msra.mxu0 %v116
    %137 = vmatpush.msra.mxu0 %v115
    %138 = vmatpush.msra.mxu0 %v114
    %139 = vmatmul.f32.gmra.mxu0 %v121
    %v140 = vpop.f32.mrf.mxu0
    %v141 = vadd.f32 0.0, %v140
    %142 = vdwg.mxu0
    %v143 = vadd.f32 %v118, %v141
    %v144 = vxor.u32 %v143, 2147483648
    %v145 = vmul.f32 %v144, 1.442695
    %v146 = vpow.pop %v145
    %v147 = vadd.f32 %v146, 1.0
    %v148 = vrcp.pop %v147
    %v149 = vmul.f32 %v147, %v148
    %v150 = vsub.f32 1.0, %v149
    %v151 = vmul.f32 %v148, %v150
    %v152 = vadd.f32 %v148, %v151
    %vm153 = vweird.f32 %v147
    %vm154 = vweird.f32 %v148
    %vm155 = vmor %vm153, %vm154
    %v156 = vsel %vm155, %v148, %v152
    %v157 = vand.u32 2147483647, %v147
    %vm158 = vcmp.eq.f32.partialorder %v157, 8.507059e+37
    %v159 = vand.u32 %v147, 2147483648
    %v160 = vor.u32 1.1754944e-38, %v159
    %v161 = vsel %vm158, %v160, %v156
    %v162 = vmul.f32 1.0, %v161
    %v163 = vtanh.pop %v143
    %v164 = vmul.f32 %v162, 0.0
    %166 = vrot.lane.b32.xlu0 %v163, 64
    %v167 = vpop.permute.xlu0 %166
    %v169 = vmul.f32 %v162, %v167
    %171 = vrot.lane.b32.xlu0 %v169, 32
    %v172 = vpop.permute.xlu0 %171
    %v174 = vadd.f32 %v164, %v172
    %v175 = vtanh.pop %v174
    %177 = vrot.lane.b32.xlu0 %v175, 64
    %v178 = vpop.permute.xlu0 %177
    %v180 = vmul.f32 %v162, %v178
    %182 = vrot.lane.b32.xlu0 %v180, 32
    %v183 = vpop.permute.xlu0 %182
    %vm185 = vcmask 254977
    %186 = vst.msk [vmem:[#allocation3 - $0x1] sm:$0x2] %vm185, %v183
    %s187 = scalar_lea.vmem [#allocation2], 8
    %v188 = vld [vmem:[%s187] sm:$0xff]
    %v189 = vsel %vm119, %v183, 0
    %191 = vmatpush.msra.mxu0 0.0
    %192 = vmatpush.msra.mxu0 0.0
    %193 = vmatpush.msra.mxu0 0.0
    %194 = vmatpush.msra.mxu0 0.0
    %195 = vmatpush.msra.mxu0 0.0
    %196 = vmatpush.msra.mxu0 0.0
    %197 = vmatpush.msra.mxu0 0.0
    %198 = vmatpush.msra.mxu0 0.0
    %199 = vmatpush.msra.mxu0 0.0
    %200 = vmatpush.msra.mxu0 0.0
    %201 = vmatpush.msra.mxu0 0.0
    %202 = vmatpush.msra.mxu0 0.0
    %203 = vmatpush.msra.mxu0 %v117
    %204 = vmatpush.msra.mxu0 %v116
    %205 = vmatpush.msra.mxu0 %v115
    %206 = vmatpush.msra.mxu0 %v114
    %207 = vmatmul.f32.gmra.mxu0 %v189
    %v208 = vpop.f32.mrf.mxu0
    %v209 = vadd.f32 0.0, %v208
    %210 = vdwg.mxu0
    %v211 = vadd.f32 %v188, %v209
    %v212 = vxor.u32 %v211, 2147483648
    %v213 = vmul.f32 %v212, 1.442695
    %v214 = vpow.pop %v213
    %v215 = vadd.f32 %v214, 1.0
    %v216 = vrcp.pop %v215
    %v217 = vmul.f32 %v215, %v216
    %v218 = vsub.f32 1.0, %v217
    %v219 = vmul.f32 %v216, %v218
    %v220 = vadd.f32 %v216, %v219
    %vm221 = vweird.f32 %v215
    %vm222 = vweird.f32 %v216
    %vm223 = vmor %vm221, %vm222
    %v224 = vsel %vm223, %v216, %v220
    %v225 = vand.u32 2147483647, %v215
    %vm226 = vcmp.eq.f32.partialorder %v225, 8.507059e+37
    %v227 = vand.u32 %v215, 2147483648
    %v228 = vor.u32 1.1754944e-38, %v227
    %v229 = vsel %vm226, %v228, %v224
    %v230 = vmul.f32 1.0, %v229
    %v231 = vtanh.pop %v211
    %v232 = vmul.f32 %v230, %v174
    %234 = vrot.lane.b32.xlu0 %v231, 64
    %v235 = vpop.permute.xlu0 %234
    %v237 = vmul.f32 %v230, %v235
    %239 = vrot.lane.b32.xlu0 %v237, 32
    %v240 = vpop.permute.xlu0 %239
    %v242 = vadd.f32 %v232, %v240
    %v243 = vtanh.pop %v242
    %245 = vrot.lane.b32.xlu0 %v243, 64
    %v246 = vpop.permute.xlu0 %245
    %v248 = vmul.f32 %v230, %v246
    %250 = vrot.lane.b32.xlu0 %v248, 32
    %v251 = vpop.permute.xlu0 %250
    %253 = vst.msk [vmem:[#allocation3] sm:$0x2] %vm185, %v251
    %s254 = scalar_lea.vmem [#allocation2], 16
    %v255 = vld [vmem:[%s254] sm:$0xff]
    %v256 = vsel %vm119, %v251, 0
    %258 = vmatpush.msra.mxu0 0.0
    %259 = vmatpush.msra.mxu0 0.0
    %260 = vmatpush.msra.mxu0 0.0
    %261 = vmatpush.msra.mxu0 0.0
    %262 = vmatpush.msra.mxu0 0.0
    %263 = vmatpush.msra.mxu0 0.0
    %264 = vmatpush.msra.mxu0 0.0
    %265 = vmatpush.msra.mxu0 0.0
    %266 = vmatpush.msra.mxu0 0.0
    %267 = vmatpush.msra.mxu0 0.0
    %268 = vmatpush.msra.mxu0 0.0
    %269 = vmatpush.msra.mxu0 0.0
    %270 = vmatpush.msra.mxu0 %v117
    %271 = vmatpush.msra.mxu0 %v116
    %272 = vmatpush.msra.mxu0 %v115
    %273 = vmatpush.msra.mxu0 %v114
    %274 = vmatmul.f32.gmra.mxu0 %v256
    %v275 = vpop.f32.mrf.mxu0
    %v276 = vadd.f32 0.0, %v275
    %277 = vdwg.mxu0
    %v278 = vadd.f32 %v255, %v276
    %v279 = vxor.u32 %v278, 2147483648
    %v280 = vmul.f32 %v279, 1.442695
    %v281 = vpow.pop %v280
    %v282 = vadd.f32 %v281, 1.0
    %v283 = vrcp.pop %v282
    %v284 = vmul.f32 %v282, %v283
    %v285 = vsub.f32 1.0, %v284
    %v286 = vmul.f32 %v283, %v285
    %v287 = vadd.f32 %v283, %v286
    %vm288 = vweird.f32 %v282
    %vm289 = vweird.f32 %v283
    %vm290 = vmor %vm288, %vm289
    %v291 = vsel %vm290, %v283, %v287
    %v292 = vand.u32 2147483647, %v282
    %vm293 = vcmp.eq.f32.partialorder %v292, 8.507059e+37
    %v294 = vand.u32 %v282, 2147483648
    %v295 = vor.u32 1.1754944e-38, %v294
    %v296 = vsel %vm293, %v295, %v291
    %v297 = vmul.f32 1.0, %v296
    %v298 = vtanh.pop %v278
    %v299 = vmul.f32 %v297, %v242
    %301 = vrot.lane.b32.xlu0 %v298, 64
    %v302 = vpop.permute.xlu0 %301
    %v304 = vmul.f32 %v297, %v302
    %306 = vrot.lane.b32.xlu0 %v304, 32
    %v307 = vpop.permute.xlu0 %306
    %v309 = vadd.f32 %v299, %v307
    %v310 = vtanh.pop %v309
    %312 = vrot.lane.b32.xlu0 %v310, 64
    %v313 = vpop.permute.xlu0 %312
    %v315 = vmul.f32 %v297, %v313
    %317 = vrot.lane.b32.xlu0 %v315, 32
    %v318 = vpop.permute.xlu0 %317
    %320 = vst.msk [vmem:[#allocation3 + $0x1] sm:$0x2] %vm185, %v318
    %s321 = scalar_lea.vmem [#allocation2], 24
    %v322 = vld [vmem:[%s321] sm:$0xff]
    %v323 = vsel %vm119, %v318, 0
    %325 = vmatpush.msra.mxu0 0.0
    %326 = vmatpush.msra.mxu0 0.0
    %327 = vmatpush.msra.mxu0 0.0
    %328 = vmatpush.msra.mxu0 0.0
    %329 = vmatpush.msra.mxu0 0.0
    %330 = vmatpush.msra.mxu0 0.0
    %331 = vmatpush.msra.mxu0 0.0
    %332 = vmatpush.msra.mxu0 0.0
    %333 = vmatpush.msra.mxu0 0.0
    %334 = vmatpush.msra.mxu0 0.0
    %335 = vmatpush.msra.mxu0 0.0
    %336 = vmatpush.msra.mxu0 0.0
    %337 = vmatpush.msra.mxu0 %v117
    %338 = vmatpush.msra.mxu0 %v116
    %339 = vmatpush.msra.mxu0 %v115
    %340 = vmatpush.msra.mxu0 %v114
    %341 = vmatmul.f32.gmra.mxu0 %v323
    %v342 = vpop.f32.mrf.mxu0
    %v343 = vadd.f32 0.0, %v342
    %344 = vdwg.mxu0
    %v345 = vadd.f32 %v322, %v343
    %v346 = vxor.u32 %v345, 2147483648
    %v347 = vmul.f32 %v346, 1.442695
    %v348 = vpow.pop %v347
    %v349 = vadd.f32 %v348, 1.0
    %v350 = vrcp.pop %v349
    %v351 = vmul.f32 %v349, %v350
    %v352 = vsub.f32 1.0, %v351
    %v353 = vmul.f32 %v350, %v352
    %v354 = vadd.f32 %v350, %v353
    %vm355 = vweird.f32 %v349
    %vm356 = vweird.f32 %v350
    %vm357 = vmor %vm355, %vm356
    %v358 = vsel %vm357, %v350, %v354
    %v359 = vand.u32 2147483647, %v349
    %vm360 = vcmp.eq.f32.partialorder %v359, 8.507059e+37
    %v361 = vand.u32 %v349, 2147483648
    %v362 = vor.u32 1.1754944e-38, %v361
    %v363 = vsel %vm360, %v362, %v358
    %v364 = vmul.f32 1.0, %v363
    %v365 = vtanh.pop %v345
    %v366 = vmul.f32 %v364, %v309
    %368 = vrot.lane.b32.xlu0 %v365, 64
    %v369 = vpop.permute.xlu0 %368
    %v371 = vmul.f32 %v364, %v369
    %373 = vrot.lane.b32.xlu0 %v371, 32
    %v374 = vpop.permute.xlu0 %373
    %v376 = vadd.f32 %v366, %v374
    %v377 = vtanh.pop %v376
    %379 = vrot.lane.b32.xlu0 %v377, 64
    %v380 = vpop.permute.xlu0 %379
    %v382 = vmul.f32 %v364, %v380
    %384 = vrot.lane.b32.xlu0 %v382, 32
    %v385 = vpop.permute.xlu0 %384
    %387 = vst.msk [vmem:[#allocation3 + $0x2] sm:$0x2] %vm185, %v385
    %s388 = scalar_lea.vmem [#allocation2], 32
    %v389 = vld [vmem:[%s388] sm:$0xff]
    %v390 = vsel %vm119, %v385, 0
    %392 = vmatpush.msra.mxu0 0.0
    %393 = vmatpush.msra.mxu0 0.0
    %394 = vmatpush.msra.mxu0 0.0
    %395 = vmatpush.msra.mxu0 0.0
    %396 = vmatpush.msra.mxu0 0.0
    %397 = vmatpush.msra.mxu0 0.0
    %398 = vmatpush.msra.mxu0 0.0
    %399 = vmatpush.msra.mxu0 0.0
    %400 = vmatpush.msra.mxu0 0.0
    %401 = vmatpush.msra.mxu0 0.0
    %402 = vmatpush.msra.mxu0 0.0
    %403 = vmatpush.msra.mxu0 0.0
    %404 = vmatpush.msra.mxu0 %v117
    %405 = vmatpush.msra.mxu0 %v116
    %406 = vmatpush.msra.mxu0 %v115
    %407 = vmatpush.msra.mxu0 %v114
    %408 = vmatmul.f32.gmra.mxu0 %v390
    %v409 = vpop.f32.mrf.mxu0
    %v410 = vadd.f32 0.0, %v409
    %411 = vdwg.mxu0
    %v412 = vadd.f32 %v389, %v410
    %v413 = vxor.u32 %v412, 2147483648
    %v414 = vmul.f32 %v413, 1.442695
    %v415 = vpow.pop %v414
    %v416 = vadd.f32 %v415, 1.0
    %v417 = vrcp.pop %v416
    %v418 = vmul.f32 %v416, %v417
    %v419 = vsub.f32 1.0, %v418
    %v420 = vmul.f32 %v417, %v419
    %v421 = vadd.f32 %v417, %v420
    %vm422 = vweird.f32 %v416
    %vm423 = vweird.f32 %v417
    %vm424 = vmor %vm422, %vm423
    %v425 = vsel %vm424, %v417, %v421
    %v426 = vand.u32 2147483647, %v416
    %vm427 = vcmp.eq.f32.partialorder %v426, 8.507059e+37
    %v428 = vand.u32 %v416, 2147483648
    %v429 = vor.u32 1.1754944e-38, %v428
    %v430 = vsel %vm427, %v429, %v425
    %v431 = vmul.f32 1.0, %v430
    %v432 = vtanh.pop %v412
    %v433 = vmul.f32 %v431, %v376
    %435 = vrot.lane.b32.xlu0 %v432, 64
    %v436 = vpop.permute.xlu0 %435
    %v438 = vmul.f32 %v431, %v436
    %440 = vrot.lane.b32.xlu0 %v438, 32
    %v441 = vpop.permute.xlu0 %440
    %v443 = vadd.f32 %v433, %v441
    %v444 = vtanh.pop %v443
    %446 = vrot.lane.b32.xlu0 %v444, 64
    %v447 = vpop.permute.xlu0 %446
    %v449 = vmul.f32 %v431, %v447
    %451 = vrot.lane.b32.xlu0 %v449, 32
    %v452 = vpop.permute.xlu0 %451
    %454 = vst.msk [vmem:[#allocation3 + $0x3] sm:$0x2] %vm185, %v452
    %s455 = scalar_lea.vmem [#allocation2], 40
    %v456 = vld [vmem:[%s455] sm:$0xff]
    %v457 = vsel %vm119, %v452, 0
    %459 = vmatpush.msra.mxu0 0.0
    %460 = vmatpush.msra.mxu0 0.0
    %461 = vmatpush.msra.mxu0 0.0
    %462 = vmatpush.msra.mxu0 0.0
    %463 = vmatpush.msra.mxu0 0.0
    %464 = vmatpush.msra.mxu0 0.0
    %465 = vmatpush.msra.mxu0 0.0
    %466 = vmatpush.msra.mxu0 0.0
    %467 = vmatpush.msra.mxu0 0.0
    %468 = vmatpush.msra.mxu0 0.0
    %469 = vmatpush.msra.mxu0 0.0
    %470 = vmatpush.msra.mxu0 0.0
    %471 = vmatpush.msra.mxu0 %v117
    %472 = vmatpush.msra.mxu0 %v116
    %473 = vmatpush.msra.mxu0 %v115
    %474 = vmatpush.msra.mxu0 %v114
    %475 = vmatmul.f32.gmra.mxu0 %v457
    %v476 = vpop.f32.mrf.mxu0
    %v477 = vadd.f32 0.0, %v476
    %478 = vdwg.mxu0
    %v479 = vadd.f32 %v456, %v477
    %v480 = vxor.u32 %v479, 2147483648
    %v481 = vmul.f32 %v480, 1.442695
    %v482 = vpow.pop %v481
    %v483 = vadd.f32 %v482, 1.0
    %v484 = vrcp.pop %v483
    %v485 = vmul.f32 %v483, %v484
    %v486 = vsub.f32 1.0, %v485
    %v487 = vmul.f32 %v484, %v486
    %v488 = vadd.f32 %v484, %v487
    %vm489 = vweird.f32 %v483
    %vm490 = vweird.f32 %v484
    %vm491 = vmor %vm489, %vm490
    %v492 = vsel %vm491, %v484, %v488
    %v493 = vand.u32 2147483647, %v483
    %vm494 = vcmp.eq.f32.partialorder %v493, 8.507059e+37
    %v495 = vand.u32 %v483, 2147483648
    %v496 = vor.u32 1.1754944e-38, %v495
    %v497 = vsel %vm494, %v496, %v492
    %v498 = vmul.f32 1.0, %v497
    %v499 = vtanh.pop %v479
    %v500 = vmul.f32 %v498, %v443
    %502 = vrot.lane.b32.xlu0 %v499, 64
    %v503 = vpop.permute.xlu0 %502
    %v505 = vmul.f32 %v498, %v503
    %507 = vrot.lane.b32.xlu0 %v505, 32
    %v508 = vpop.permute.xlu0 %507
    %v510 = vadd.f32 %v500, %v508
    %v511 = vtanh.pop %v510
    %513 = vrot.lane.b32.xlu0 %v511, 64
    %v514 = vpop.permute.xlu0 %513
    %v516 = vmul.f32 %v498, %v514
    %518 = vrot.lane.b32.xlu0 %v516, 32
    %v519 = vpop.permute.xlu0 %518
    %521 = vst.msk [vmem:[#allocation3 + $0x4] sm:$0x2] %vm185, %v519
    %s522 = scalar_lea.vmem [#allocation2], 48
    %v523 = vld [vmem:[%s522] sm:$0xff]
    %v524 = vsel %vm119, %v519, 0
    %526 = vmatpush.msra.mxu0 0.0
    %527 = vmatpush.msra.mxu0 0.0
    %528 = vmatpush.msra.mxu0 0.0
    %529 = vmatpush.msra.mxu0 0.0
    %530 = vmatpush.msra.mxu0 0.0
    %531 = vmatpush.msra.mxu0 0.0
    %532 = vmatpush.msra.mxu0 0.0
    %533 = vmatpush.msra.mxu0 0.0
    %534 = vmatpush.msra.mxu0 0.0
    %535 = vmatpush.msra.mxu0 0.0
    %536 = vmatpush.msra.mxu0 0.0
    %537 = vmatpush.msra.mxu0 0.0
    %538 = vmatpush.msra.mxu0 %v117
    %539 = vmatpush.msra.mxu0 %v116
    %540 = vmatpush.msra.mxu0 %v115
    %541 = vmatpush.msra.mxu0 %v114
    %542 = vmatmul.f32.gmra.mxu0 %v524
    %v543 = vpop.f32.mrf.mxu0
    %v544 = vadd.f32 0.0, %v543
    %545 = vdwg.mxu0
    %v546 = vadd.f32 %v523, %v544
    %v547 = vxor.u32 %v546, 2147483648
    %v548 = vmul.f32 %v547, 1.442695
    %v549 = vpow.pop %v548
    %v550 = vadd.f32 %v549, 1.0
    %v551 = vrcp.pop %v550
    %v552 = vmul.f32 %v550, %v551
    %v553 = vsub.f32 1.0, %v552
    %v554 = vmul.f32 %v551, %v553
    %v555 = vadd.f32 %v551, %v554
    %vm556 = vweird.f32 %v550
    %vm557 = vweird.f32 %v551
    %vm558 = vmor %vm556, %vm557
    %v559 = vsel %vm558, %v551, %v555
    %v560 = vand.u32 2147483647, %v550
    %vm561 = vcmp.eq.f32.partialorder %v560, 8.507059e+37
    %v562 = vand.u32 %v550, 2147483648
    %v563 = vor.u32 1.1754944e-38, %v562
    %v564 = vsel %vm561, %v563, %v559
    %v565 = vmul.f32 1.0, %v564
    %v566 = vtanh.pop %v546
    %v567 = vmul.f32 %v565, %v510
    %569 = vrot.lane.b32.xlu0 %v566, 64
    %v570 = vpop.permute.xlu0 %569
    %v572 = vmul.f32 %v565, %v570
    %574 = vrot.lane.b32.xlu0 %v572, 32
    %v575 = vpop.permute.xlu0 %574
    %v577 = vadd.f32 %v567, %v575
    %v578 = vtanh.pop %v577
    %580 = vrot.lane.b32.xlu0 %v578, 64
    %v581 = vpop.permute.xlu0 %580
    %v583 = vmul.f32 %v565, %v581
    %585 = vrot.lane.b32.xlu0 %v583, 32
    %v586 = vpop.permute.xlu0 %585
    %588 = vst.msk [vmem:[#allocation3 + $0x5] sm:$0x2] %vm185, %v586
    %s589 = scalar_lea.vmem [#allocation2], 56
    %v590 = vld [vmem:[%s589] sm:$0xff]
    %v591 = vsel %vm119, %v586, 0
    %593 = vmatpush.msra.mxu0 0.0
    %594 = vmatpush.msra.mxu0 0.0
    %595 = vmatpush.msra.mxu0 0.0
    %596 = vmatpush.msra.mxu0 0.0
    %597 = vmatpush.msra.mxu0 0.0
    %598 = vmatpush.msra.mxu0 0.0
    %599 = vmatpush.msra.mxu0 0.0
    %600 = vmatpush.msra.mxu0 0.0
    %601 = vmatpush.msra.mxu0 0.0
    %602 = vmatpush.msra.mxu0 0.0
    %603 = vmatpush.msra.mxu0 0.0
    %604 = vmatpush.msra.mxu0 0.0
    %605 = vmatpush.msra.mxu0 %v117
    %606 = vmatpush.msra.mxu0 %v116
    %607 = vmatpush.msra.mxu0 %v115
    %608 = vmatpush.msra.mxu0 %v114
    %609 = vmatmul.f32.gmra.mxu0 %v591
    %v610 = vpop.f32.mrf.mxu0
    %v611 = vadd.f32 0.0, %v610
    %612 = vdwg.mxu0
    %v613 = vadd.f32 %v590, %v611
    %v614 = vxor.u32 %v613, 2147483648
    %v615 = vmul.f32 %v614, 1.442695
    %v616 = vpow.pop %v615
    %v617 = vadd.f32 %v616, 1.0
    %v618 = vrcp.pop %v617
    %v619 = vmul.f32 %v617, %v618
    %v620 = vsub.f32 1.0, %v619
    %v621 = vmul.f32 %v618, %v620
    %v622 = vadd.f32 %v618, %v621
    %vm623 = vweird.f32 %v617
    %vm624 = vweird.f32 %v618
    %vm625 = vmor %vm623, %vm624
    %v626 = vsel %vm625, %v618, %v622
    %v627 = vand.u32 2147483647, %v617
    %vm628 = vcmp.eq.f32.partialorder %v627, 8.507059e+37
    %v629 = vand.u32 %v617, 2147483648
    %v630 = vor.u32 1.1754944e-38, %v629
    %v631 = vsel %vm628, %v630, %v626
    %v632 = vmul.f32 1.0, %v631
    %v633 = vtanh.pop %v613
    %v634 = vmul.f32 %v632, %v577
    %636 = vrot.lane.b32.xlu0 %v633, 64
    %v637 = vpop.permute.xlu0 %636
    %v639 = vmul.f32 %v632, %v637
    %641 = vrot.lane.b32.xlu0 %v639, 32
    %v642 = vpop.permute.xlu0 %641
    %v644 = vadd.f32 %v634, %v642
    %v645 = vtanh.pop %v644
    %647 = vrot.lane.b32.xlu0 %v645, 64
    %v648 = vpop.permute.xlu0 %647
    %v650 = vmul.f32 %v632, %v648
    %652 = vrot.lane.b32.xlu0 %v650, 32
    %v653 = vpop.permute.xlu0 %652
    %655 = vst.msk [vmem:[#allocation3 + $0x6] sm:$0x2] %vm185, %v653
    %v656 = vld [vmem:[#allocation3] sm:$0xff]
    %v657 = vld [vmem:[%s4] sm:$0xff]
    %v658 = vld [vmem:[%s4 + $0x8] sm:$0xff]
    %v659 = vld [vmem:[%s4 + $0x10] sm:$0xff]
    %v660 = vld [vmem:[%s4 + $0x18] sm:$0xff]
    %v661 = vld [vmem:[%s5] sm:$0x1]
    %v663 = vperm.slane %v661, 0
    %v666 = vsel %vm119, %v656, 0
    %668 = vmatpush.msra.mxu0 0.0
    %669 = vmatpush.msra.mxu0 0.0
    %670 = vmatpush.msra.mxu0 0.0
    %671 = vmatpush.msra.mxu0 0.0
    %672 = vmatpush.msra.mxu0 0.0
    %673 = vmatpush.msra.mxu0 0.0
    %674 = vmatpush.msra.mxu0 0.0
    %675 = vmatpush.msra.mxu0 0.0
    %676 = vmatpush.msra.mxu0 0.0
    %677 = vmatpush.msra.mxu0 0.0
    %678 = vmatpush.msra.mxu0 0.0
    %679 = vmatpush.msra.mxu0 0.0
    %680 = vmatpush.msra.mxu0 %v660
    %681 = vmatpush.msra.mxu0 %v659
    %682 = vmatpush.msra.mxu0 %v658
    %683 = vmatpush.msra.mxu0 %v657
    %684 = vmatmul.f32.gmra.mxu0 %v666
    %v685 = vpop.f32.mrf.mxu0
    %v686 = vadd.f32 %v663, %v685
    %687 = vdwg.mxu0
    %vm688 = vcmask 31744
    %689 = vst.msk [vmem:[%s6] sm:$0xff] %vm688, %v686
    %v690 = vsel %vm119, %v653, %v644
    %vm691 = vcmask 523264
    %692 = vst.msk [vmem:[#allocation4] sm:$0xff] %vm691, %v690
    // Predicated region
    $region26: #{tpu_custom_call.1} parent=1 // pred_check
      _
    $region27: #{tpu_custom_call.1} parent=1 // pred_check_branch
      %694 = sbr.rel (0) target = $region29
    $region28: #{tpu_custom_call.1} parent=1 // pred_region
      _
    $region29: #{tpu_custom_call.1} parent=1 // pred_fallthru
      _
    // Predicated region
    $region30: #{tpu_custom_call.1} parent=1 // pred_check
      _
    $region31: #{tpu_custom_call.1} parent=1 // pred_check_branch
      %696 = sbr.rel (0) target = $region33
    $region32: #{tpu_custom_call.1} parent=1 // pred_region
      %698 = vsyncadd [#allocation5], 0
      %s700 = sshll.u32 [#allocation4], 4
      %s701 = int_to_ptr.vmem [resolvable:$true] %s700
      %s702 = sshll.u32 %s7, 4
      %s703 = int_to_ptr.hbm [resolvable:$true] %s702
      %705 = dma.vmem_to_hbm [thread:$0]  %s701, 128, %s703, [#allocation5]
    $region33: #{tpu_custom_call.1} parent=1 // pred_fallthru
      _
    // Predicated region
    $region34: #{tpu_custom_call.1} parent=1 // pred_check
      _
    $region35: #{tpu_custom_call.1} parent=1 // pred_check_branch
      %707 = sbr.rel (0) target = $region37
    $region36: #{tpu_custom_call.1} parent=1 // pred_region
      _
    $region37: #{tpu_custom_call.1} parent=1 // pred_fallthru
      _
    // Predicated region
    $region38: #{tpu_custom_call.1} parent=1 // pred_check
      _
    $region39: #{tpu_custom_call.1} parent=1 // pred_check_branch
      %709 = sbr.rel (0) target = $region41
    $region40: #{tpu_custom_call.1} parent=1 // pred_region
      %711 = dma.done [#allocation5], 128
    $region41: #{tpu_custom_call.1} parent=1 // pred_fallthru
      _
    %712 = vsyncpa [#allocation5], 1

</llo_original>
